<compile_context>
chip_gen: v7x
topology: tpu7x:2x2x1
jax: 0.10.0
libtpu: 0.0.40
codegen_flags: <defaults>
</compile_context>

<pallas_src>
import jax
import jax.numpy as jnp
from jax import lax
from jax.experimental import pallas as pl
from jax.experimental.pallas import tpu as pltpu

LANE = 128      # TPU lane width -> batch-tile granularity (batch sits on lanes)
SUBLANE = 8     # f32 sublane granularity
MAX_TB = 2048   # max batch-tile rows


def _round_up(n: int, m: int) -> int:
    return (n + m - 1) // m * m


def _cdiv(a: int, b: int) -> int:
    return (a + b - 1) // b


def eeg_intent_kernel(x_ref, w1_ref, b1_ref, w2_ref, b2_ref, o_ref):
    """Transposed MLP for one batch tile: o = (ReLU(x @ W1 + b1) @ W2 + b2)^T.

    x_ref : [TB, I]  f32  streamed per grid step
    w1_ref: [I, H]   f32  resident across the grid
    b1_ref: [H, 1]   f32  resident
    w2_ref: [H, C]   f32  resident
    b2_ref: [C, 1]   f32  resident
    o_ref : [C, TB]  f32  streamed per grid step (lane-dense store, no pad)
    """
    x = x_ref[...]
    # h^T = W1^T @ x^T : contract the I axes -> [H, TB]  (batch on lanes).
    h = lax.dot_general(
        w1_ref[...], x,
        dimension_numbers=(((0,), (1,)), ((), ())),
        preferred_element_type=jnp.float32)
    h = jnp.maximum(h + b1_ref[...], 0.0)
    # y^T = W2^T @ h^T : contract the H axes -> [C, TB].  h stays f32 (no bf16
    # re-quantization) to match the PyTorch f32 forward.
    y = lax.dot_general(
        w2_ref[...], h,
        dimension_numbers=(((0,), (0,)), ((), ())),
        preferred_element_type=jnp.float32)
    o_ref[...] = (y + b2_ref[...]).astype(o_ref.dtype)


def _vmem_bytes_estimate(tb: int, input_size: int, hidden: int, num_intents: int) -> int:
    """Rough VMEM footprint, accounting for (8,128) layout padding."""
    f32 = 4
    lane = lambda n: _round_up(n, LANE)
    sub = lambda n: _round_up(n, SUBLANE)
    return f32 * (
        2 * tb * lane(input_size)                      # x tiles, double-buffered, lane-padded
        + 2 * sub(num_intents) * tb                    # out tiles, double-buffered
        + sub(input_size) * lane(hidden)               # resident W1
        + sub(hidden) * lane(num_intents)              # resident W2
        + sub(hidden) * LANE + sub(num_intents) * LANE  # resident biases (lane-padded)
        + sub(hidden) * tb + sub(num_intents) * tb     # h / y f32 intermediates
    )


def eeg_intent_net(x, w1, b1, w2, b2):
    """Fused MLP forward.  x: [B, I]; w1: [I, H]; w2: [H, C]; biases broadcast."""
    batch, input_size = x.shape
    hidden = w1.shape[1]
    num_intents = w2.shape[1]

    x = jnp.asarray(x, jnp.float32)
    w1 = jnp.asarray(w1, jnp.float32)
    w2 = jnp.asarray(w2, jnp.float32)
    b1 = jnp.asarray(b1, jnp.float32).reshape(hidden, 1)
    b2 = jnp.asarray(b2, jnp.float32).reshape(num_intents, 1)

    # ---- per-generation VMEM budget (128 MiB v5e/v6e, 64 MiB v7x) ----------
    try:
        vmem_cap = int(pltpu.get_tpu_info().vmem_capacity_bytes)
    except Exception:
        vmem_cap = 64 * 1024 * 1024
    vmem_budget = max(vmem_cap - (16 << 20), 16 << 20)

    # ---- batch tile: multiple of 128 (lane-dense output), large to amortize
    #      per-step overhead, balanced across v7x's two TensorCores ----------
    tb = min(MAX_TB, _round_up(batch, LANE))
    if batch >= 2 * LANE:
        tb = min(tb, _round_up(_cdiv(batch, 2), LANE))   # guarantee >= 2 grid steps
    while tb > LANE and _vmem_bytes_estimate(tb, input_size, hidden, num_intents) > vmem_budget:
        tb -= LANE
    # TODO(synk): if the resident f32 weights alone exceed the VMEM budget
    # (very large input_size * hidden), a K-tiled variant would be needed.

    grid = (_cdiv(batch, tb),)   # ragged last block is masked; x is not padded

    vmem_needed = _vmem_bytes_estimate(tb, input_size, hidden, num_intents)
    vmem_limit = int(min(max(2 * vmem_needed, 16 << 20), vmem_budget))

    cost = pl.CostEstimate(
        flops=2 * batch * (input_size * hidden + hidden * num_intents),
        transcendentals=0,
        bytes_accessed=4 * (batch * input_size
                            + input_size * hidden + hidden * num_intents
                            + hidden + num_intents
                            + batch * num_intents),
    )

    out_t = pl.pallas_call(
        eeg_intent_kernel,
        out_shape=jax.ShapeDtypeStruct((num_intents, batch), jnp.float32),
        grid=grid,
        in_specs=[
            pl.BlockSpec((tb, input_size), lambda i: (i, 0)),        # x : streamed
            pl.BlockSpec((input_size, hidden), lambda i: (0, 0)),    # W1: resident
            pl.BlockSpec((hidden, 1), lambda i: (0, 0)),             # b1: resident
            pl.BlockSpec((hidden, num_intents), lambda i: (0, 0)),   # W2: resident
            pl.BlockSpec((num_intents, 1), lambda i: (0, 0)),        # b2: resident
        ],
        out_specs=pl.BlockSpec((num_intents, tb), lambda i: (0, i)),
        compiler_params=pltpu.CompilerParams(
            dimension_semantics=("parallel",),   # shard batch grid across TCs (v7x)
            vmem_limit_bytes=vmem_limit,
        ),
        cost_estimate=cost,
    )(x, w1, b1, w2, b2)

    return out_t.T   # [batch, num_intents]


def init_params(key, input_size, hidden_size, num_intents):
    """Deterministic init mirroring torch.nn.Linear (uniform +-1/sqrt(fan_in))."""
    k1, k2, k3, k4 = jax.random.split(key, 4)
    bound1 = 1.0 / jnp.sqrt(float(input_size))
    bound2 = 1.0 / jnp.sqrt(float(hidden_size))
    # stored as [in, out]  (PyTorch stores [out, in]; forward is x @ W.T + b)
    w1 = jax.random.uniform(k1, (input_size, hidden_size), jnp.float32, -bound1, bound1)
    b1 = jax.random.uniform(k2, (hidden_size,), jnp.float32, -bound1, bound1)
    w2 = jax.random.uniform(k3, (hidden_size, num_intents), jnp.float32, -bound2, bound2)
    b2 = jax.random.uniform(k4, (num_intents,), jnp.float32, -bound2, bound2)
    return w1, b1, w2, b2


if __name__ == "__main__":
    # Small shapes consistent with the module's forward: flat feature vector in,
    # intent logits out.
    batch, input_size, hidden_size, num_intents = 8, 16, 32, 8

    key = jax.random.PRNGKey(0)
    kx, kp = jax.random.split(key)
    x = jax.random.normal(kx, (batch, input_size), jnp.float32)
    w1, b1, w2, b2 = init_params(kp, input_size, hidden_size, num_intents)

    out = eeg_intent_net(x, w1, b1, w2, b2)
    out = jax.block_until_ready(out)
    assert out.shape == (batch, num_intents)

    # Pure-f32 forward of the PyTorch module (tolerance covers MXU matmul
    # precision for f32 operands).
    ref = jnp.maximum(x @ w1 + b1.reshape(1, -1), 0.0) @ w2 + b2.reshape(1, -1)
    assert jnp.allclose(out, ref, atol=2e-2, rtol=2e-2), (
        float(jnp.max(jnp.abs(out - ref))))

    print("KERNEL_OK")
</pallas_src>

<mosaic_0001>
module attributes {stable_mosaic.version = 11 : i64} {
  func.func @eeg_intent_kernel(%arg0: i32, %arg1: memref<128x16xf32, #tpu.memory_space<vmem>>, %arg2: memref<16x32xf32, #tpu.memory_space<vmem>>, %arg3: memref<32x1xf32, #tpu.memory_space<vmem>>, %arg4: memref<32x8xf32, #tpu.memory_space<vmem>>, %arg5: memref<8x1xf32, #tpu.memory_space<vmem>>, %arg6: memref<8x128xf32, #tpu.memory_space<vmem>>) attributes {dimension_semantics = [#tpu.dimension_semantics<parallel>], iteration_bounds = array<i64: 1>, scalar_prefetch = 0 : i64, scratch_operands = 0 : i64, tpu.core_type = #tpu.core_type<tc>, window_params = [{transform_indices = @transform_0, window_bounds = array<i64: 128, 16>}, {pipeline_mode = #tpu.pipeline_mode<synchronous>, transform_indices = @transform_1, window_bounds = array<i64: 16, 32>}, {pipeline_mode = #tpu.pipeline_mode<synchronous>, transform_indices = @transform_2, window_bounds = array<i64: 32, 1>}, {pipeline_mode = #tpu.pipeline_mode<synchronous>, transform_indices = @transform_3, window_bounds = array<i64: 32, 8>}, {pipeline_mode = #tpu.pipeline_mode<synchronous>, transform_indices = @transform_4, window_bounds = array<i64: 8, 1>}, {transform_indices = @transform_5, window_bounds = array<i64: 8, 128>}]} {
    %c0 = arith.constant 0 : index
    %c0_0 = arith.constant 0 : index
    %0 = vector.load %arg1[%c0, %c0_0] : memref<128x16xf32, #tpu.memory_space<vmem>>, vector<128x16xf32>
    %c0_1 = arith.constant 0 : index
    %c0_2 = arith.constant 0 : index
    %1 = vector.load %arg2[%c0_1, %c0_2] : memref<16x32xf32, #tpu.memory_space<vmem>>, vector<16x32xf32>
    %cst = arith.constant dense<0.000000e+00> : vector<32x128xf32>
    %2 = tpu.matmul %1, %0, %cst {dimension_numbers = #tpu.dot_dimension_numbers<[0], [1], [1], [0], [0, 1, 1, 0], [], []>} : vector<16x32xf32>, vector<128x16xf32>, vector<32x128xf32> -> vector<32x128xf32>
    %c0_3 = arith.constant 0 : index
    %c0_4 = arith.constant 0 : index
    %3 = vector.load %arg3[%c0_3, %c0_4] : memref<32x1xf32, #tpu.memory_space<vmem>>, vector<32x1xf32>
    %4 = vector.broadcast %3 : vector<32x1xf32> to vector<32x128xf32>
    %5 = arith.addf %2, %4 : vector<32x128xf32>
    %cst_5 = arith.constant 0.000000e+00 : f32
    %6 = vector.broadcast %cst_5 : f32 to vector<32x128xf32>
    %7 = arith.maximumf %5, %6 : vector<32x128xf32>
    %c0_6 = arith.constant 0 : index
    %c0_7 = arith.constant 0 : index
    %8 = vector.load %arg4[%c0_6, %c0_7] : memref<32x8xf32, #tpu.memory_space<vmem>>, vector<32x8xf32>
    %cst_8 = arith.constant dense<0.000000e+00> : vector<8x128xf32>
    %9 = tpu.matmul %8, %7, %cst_8 {dimension_numbers = #tpu.dot_dimension_numbers<[0], [0], [1], [1], [0, 1, 1, 1], [], []>} : vector<32x8xf32>, vector<32x128xf32>, vector<8x128xf32> -> vector<8x128xf32>
    %c0_9 = arith.constant 0 : index
    %c0_10 = arith.constant 0 : index
    %10 = vector.load %arg5[%c0_9, %c0_10] : memref<8x1xf32, #tpu.memory_space<vmem>>, vector<8x1xf32>
    %11 = vector.broadcast %10 : vector<8x1xf32> to vector<8x128xf32>
    %12 = arith.addf %9, %11 : vector<8x128xf32>
    %c0_11 = arith.constant 0 : index
    %c0_12 = arith.constant 0 : index
    %13 = vector.load %arg6[%c0_11, %c0_12] : memref<8x128xf32, #tpu.memory_space<vmem>>, vector<8x128xf32>
    tpu.vector_store %arg6[%c0_11, %c0_12], %12 {strides = array<i32>} : memref<8x128xf32, #tpu.memory_space<vmem>>, vector<8x128xf32>,
    return
  }
  func.func @transform_0(%arg0: i32) -> (i32, i32) {
    %c0_i32 = arith.constant 0 : i32
    %c0_i32_0 = arith.constant 0 : i32
    return %arg0, %c0_i32 : i32, i32
  }
  func.func @transform_1(%arg0: i32) -> (i32, i32) {
    %c0_i32 = arith.constant 0 : i32
    %c0_i32_0 = arith.constant 0 : i32
    %c0_i32_1 = arith.constant 0 : i32
    return %c0_i32, %c0_i32_0 : i32, i32
  }
  func.func @transform_2(%arg0: i32) -> (i32, i32) {
    %c0_i32 = arith.constant 0 : i32
    %c0_i32_0 = arith.constant 0 : i32
    %c0_i32_1 = arith.constant 0 : i32
    return %c0_i32, %c0_i32_0 : i32, i32
  }
  func.func @transform_3(%arg0: i32) -> (i32, i32) {
    %c0_i32 = arith.constant 0 : i32
    %c0_i32_0 = arith.constant 0 : i32
    %c0_i32_1 = arith.constant 0 : i32
    return %c0_i32, %c0_i32_0 : i32, i32
  }
  func.func @transform_4(%arg0: i32) -> (i32, i32) {
    %c0_i32 = arith.constant 0 : i32
    %c0_i32_0 = arith.constant 0 : i32
    %c0_i32_1 = arith.constant 0 : i32
    return %c0_i32, %c0_i32_0 : i32, i32
  }
  func.func @transform_5(%arg0: i32) -> (i32, i32) {
    %c0_i32 = arith.constant 0 : i32
    %c0_i32_0 = arith.constant 0 : i32
    return %c0_i32, %arg0 : i32, i32
  }
}

</mosaic_0001>

<llo_original>
// kernel: tpu_custom_call.1
$region0: #{tpu_custom_call.1}
  #allocation0 [shape = 'u32[]', space=smem, size = 0x4, offset = 0x4, fixed_abs, tag = 'smem constant byte address 0x4 - core index']
  #allocation1 [shape = 'u32[144,128]{1,0:T(1,128)}', space=vmem, size = 0x12000, scoped, tag = 'internal scratch']
  %s0 = inlined_call_operand.vmem [shape: f32[8,16], index: 0, kind: input, shape index: {}]
  %s1 = inlined_call_operand.vmem [shape: f32[16,32], index: 1, kind: input, shape index: {}]
  %s2 = inlined_call_operand.vmem [shape: f32[32,1], index: 2, kind: input, shape index: {}]
  %s3 = inlined_call_operand.vmem [shape: f32[32,8], index: 3, kind: input, shape index: {}]
  %s4 = inlined_call_operand.vmem [shape: f32[8,1], index: 4, kind: input, shape index: {}]
  %s5 = inlined_call_operand.hbm [shape: f32[8,8], index: 5, kind: output, shape index: {}]
  %s6 = sld [smem:[#allocation0]]
  $region30: #{tpu_custom_call.1} parent=0
    _
  %s8 = ssub.s32 1, %s6
  %s9 = scalar_select 0, %s8, %s6
  $region1: #{tpu_custom_call.1} parent=0
    #allocation2 [shape = 'u8[4096]{0}', space=vmem, size = 0x1000, scoped, tag = 'output window, operand 0, single buffered']
    #allocation3 [shape = 's32[1]{0}', space=sflag, size = 0x4, scoped, tag = 'scoped memory for tpu_custom_call.1']
    %10 = vsyncpa [#allocation3], 0
    // Predicated region
    $region2: #{tpu_custom_call.1} parent=1 // pred_check
      _
    $region3: #{tpu_custom_call.1} parent=1 // pred_check_branch
      %12 = sbr.rel (0) target = $region5
    $region4: #{tpu_custom_call.1} parent=1 // pred_region
      _
    $region5: #{tpu_custom_call.1} parent=1 // pred_fallthru
      _
    // Predicated region
    $region6: #{tpu_custom_call.1} parent=1 // pred_check
      _
    $region7: #{tpu_custom_call.1} parent=1 // pred_check_branch
      %14 = sbr.rel (0) target = $region9
    $region8: #{tpu_custom_call.1} parent=1 // pred_region
      _
    $region9: #{tpu_custom_call.1} parent=1 // pred_fallthru
      _
    // Predicated region
    $region10: #{tpu_custom_call.1} parent=1 // pred_check
      _
    $region11: #{tpu_custom_call.1} parent=1 // pred_check_branch
      %16 = sbr.rel (0) target = $region13
    $region12: #{tpu_custom_call.1} parent=1 // pred_region
      _
    $region13: #{tpu_custom_call.1} parent=1 // pred_fallthru
      _
    // Predicated region
    $region14: #{tpu_custom_call.1} parent=1 // pred_check
      _
    $region15: #{tpu_custom_call.1} parent=1 // pred_check_branch
      %18 = sbr.rel (0) target = $region17
    $region16: #{tpu_custom_call.1} parent=1 // pred_region
      _
    $region17: #{tpu_custom_call.1} parent=1 // pred_fallthru
      _
    // Predicated region
    $region18: #{tpu_custom_call.1} parent=1 // pred_check
      _
    $region19: #{tpu_custom_call.1} parent=1 // pred_check_branch
      %20 = sbr.rel (0) target = $region21
    $region20: #{tpu_custom_call.1} parent=1 // pred_region
      _
    $region21: #{tpu_custom_call.1} parent=1 // pred_fallthru
      _
    %v21 = vld [vmem:[%s0] sm:$0xff]
    %v22 = vld [vmem:[%s0 + $0x8] sm:$0xff]
    %v23 = vld [vmem:[%s0 + $0x10] sm:$0xff]
    %v24 = vld [vmem:[%s0 + $0x18] sm:$0xff]
    %v25 = vld [vmem:[%s0 + $0x20] sm:$0xff]
    %v26 = vld [vmem:[%s0 + $0x28] sm:$0xff]
    %v27 = vld [vmem:[%s0 + $0x30] sm:$0xff]
    %v28 = vld [vmem:[%s0 + $0x38] sm:$0xff]
    %v29 = vld [vmem:[%s0 + $0x40] sm:$0xff]
    %v30 = vld [vmem:[%s0 + $0x48] sm:$0xff]
    %v31 = vld [vmem:[%s0 + $0x50] sm:$0xff]
    %v32 = vld [vmem:[%s0 + $0x58] sm:$0xff]
    %v33 = vld [vmem:[%s0 + $0x60] sm:$0xff]
    %v34 = vld [vmem:[%s0 + $0x68] sm:$0xff]
    %v35 = vld [vmem:[%s0 + $0x70] sm:$0xff]
    %v36 = vld [vmem:[%s0 + $0x78] sm:$0xff]
    %v37 = vld [vmem:[%s1] sm:$0xff]
    %v38 = vld [vmem:[%s1 + $0x8] sm:$0xff]
    %v39 = vld [vmem:[%s2] sm:$0xff]
    %v40 = vld [vmem:[%s2 + $0x8] sm:$0xff]
    %v41 = vld [vmem:[%s2 + $0x10] sm:$0xff]
    %v42 = vld [vmem:[%s2 + $0x18] sm:$0xff]
    %44 = vset.pattern.permute.xlu0 0
    %45 = vperm.xlu0 %44, %v39
    %v46 = vpop.permute.xlu0 %45
    %49 = vset.pattern.permute.xlu0 0
    %50 = vperm.xlu0 %49, %v40
    %v51 = vpop.permute.xlu0 %50
    %54 = vset.pattern.permute.xlu0 0
    %55 = vperm.xlu0 %54, %v41
    %v56 = vpop.permute.xlu0 %55
    %59 = vset.pattern.permute.xlu0 0
    %60 = vperm.xlu0 %59, %v42
    %v61 = vpop.permute.xlu0 %60
    %63 = vxpose.xlu0.b32.start [1/16] %v37, 128
    %64 = vxpose.xlu0.b32.cont [2/16] %v38, 128
    %65 = vxpose.xlu0.b32.cont [3/16] 0.0, 128
    %66 = vxpose.xlu0.b32.cont [4/16] 0.0, 128
    %67 = vxpose.xlu0.b32.cont [5/16] 0.0, 128
    %68 = vxpose.xlu0.b32.cont [6/16] 0.0, 128
    %69 = vxpose.xlu0.b32.cont [7/16] 0.0, 128
    %70 = vxpose.xlu0.b32.cont [8/16] 0.0, 128
    %71 = vxpose.xlu0.b32.cont [9/16] 0.0, 128
    %72 = vxpose.xlu0.b32.cont [10/16] 0.0, 128
    %73 = vxpose.xlu0.b32.cont [11/16] 0.0, 128
    %74 = vxpose.xlu0.b32.cont [12/16] 0.0, 128
    %75 = vxpose.xlu0.b32.cont [13/16] 0.0, 128
    %76 = vxpose.xlu0.b32.cont [14/16] 0.0, 128
    %77 = vxpose.xlu0.b32.cont [15/16] 0.0, 128
    %78 = vxpose.xlu0.b32.end [16/16] 0.0, 128
    %v79 = vpop.trf.xlu0
    %v80 = vpop.trf.xlu0
    %v81 = vpop.trf.xlu0
    %v82 = vpop.trf.xlu0
    %v83 = vpop.trf.xlu0
    %v84 = vpop.trf.xlu0
    %v85 = vpop.trf.xlu0
    %v86 = vpop.trf.xlu0
    %v87 = vpop.trf.xlu0
    %v88 = vpop.trf.xlu0
    %v89 = vpop.trf.xlu0
    %v90 = vpop.trf.xlu0
    %v91 = vpop.trf.xlu0
    %v92 = vpop.trf.xlu0
    %v93 = vpop.trf.xlu0
    %v94 = vpop.trf.xlu0
    %vm95 = vcmask 130048
    %v97 = vsel %vm95, %v79, 0
    %v100 = vsel %vm95, %v80, 0
    %v103 = vsel %vm95, %v81, 0
    %v106 = vsel %vm95, %v82, 0
    %v109 = vsel %vm95, %v21, 0
    %v112 = vsel %vm95, %v22, 0
    %v115 = vsel %vm95, %v23, 0
    %v118 = vsel %vm95, %v24, 0
    %v121 = vsel %vm95, %v25, 0
    %v124 = vsel %vm95, %v26, 0
    %v127 = vsel %vm95, %v27, 0
    %v130 = vsel %vm95, %v28, 0
    %v133 = vsel %vm95, %v29, 0
    %v136 = vsel %vm95, %v30, 0
    %v139 = vsel %vm95, %v31, 0
    %v142 = vsel %vm95, %v32, 0
    %v145 = vsel %vm95, %v33, 0
    %v148 = vsel %vm95, %v34, 0
    %v151 = vsel %vm95, %v35, 0
    %v154 = vsel %vm95, %v36, 0
    %156 = vmatprep.subr.mxu0 0.0
    %157 = vmatpush1.xpose.msra.mxu0 %v109
    %158 = vmatprep.subr.mxu0 0.0
    %159 = vmatpush1.xpose.msra.mxu0 %v112
    %160 = vmatprep.subr.mxu0 0.0
    %161 = vmatpush1.xpose.msra.mxu0 %v115
    %162 = vmatprep.subr.mxu0 0.0
    %163 = vmatpush1.xpose.msra.mxu0 %v118
    %164 = vmatprep.subr.mxu0 0.0
    %165 = vmatpush1.xpose.msra.mxu0 %v121
    %166 = vmatprep.subr.mxu0 0.0
    %167 = vmatpush1.xpose.msra.mxu0 %v124
    %168 = vmatprep.subr.mxu0 0.0
    %169 = vmatpush1.xpose.msra.mxu0 %v127
    %170 = vmatprep.subr.mxu0 0.0
    %171 = vmatpush1.xpose.msra.mxu0 %v130
    %172 = vmatprep.subr.mxu0 0.0
    %173 = vmatpush1.xpose.msra.mxu0 %v133
    %174 = vmatprep.subr.mxu0 0.0
    %175 = vmatpush1.xpose.msra.mxu0 %v136
    %176 = vmatprep.subr.mxu0 0.0
    %177 = vmatpush1.xpose.msra.mxu0 %v139
    %178 = vmatprep.subr.mxu0 0.0
    %179 = vmatpush1.xpose.msra.mxu0 %v142
    %180 = vmatprep.subr.mxu0 0.0
    %181 = vmatpush1.xpose.msra.mxu0 %v145
    %182 = vmatprep.subr.mxu0 0.0
    %183 = vmatpush1.xpose.msra.mxu0 %v148
    %184 = vmatprep.subr.mxu0 0.0
    %185 = vmatpush1.xpose.msra.mxu0 %v151
    %186 = vmatprep.subr.mxu0 0.0
    %187 = vmatpush1.xpose.msra.mxu0 %v154
    %188 = vmatprep.subr.mxu0 0.0
    %189 = vmatpush1.xpose.msra.mxu0 0.0
    %190 = vmatprep.subr.mxu0 0.0
    %191 = vmatpush1.xpose.msra.mxu0 0.0
    %192 = vmatprep.subr.mxu0 0.0
    %193 = vmatpush1.xpose.msra.mxu0 0.0
    %194 = vmatprep.subr.mxu0 0.0
    %195 = vmatpush1.xpose.msra.mxu0 0.0
    %196 = vmatprep.subr.mxu0 0.0
    %197 = vmatpush1.xpose.msra.mxu0 0.0
    %198 = vmatprep.subr.mxu0 0.0
    %199 = vmatpush1.xpose.msra.mxu0 0.0
    %200 = vmatprep.subr.mxu0 0.0
    %201 = vmatpush1.xpose.msra.mxu0 0.0
    %202 = vmatprep.subr.mxu0 0.0
    %203 = vmatpush1.xpose.msra.mxu0 0.0
    %204 = vmatprep.subr.mxu0 0.0
    %205 = vmatpush1.xpose.msra.mxu0 0.0
    %206 = vmatprep.subr.mxu0 0.0
    %207 = vmatpush1.xpose.msra.mxu0 0.0
    %208 = vmatprep.subr.mxu0 0.0
    %209 = vmatpush1.xpose.msra.mxu0 0.0
    %210 = vmatprep.subr.mxu0 0.0
    %211 = vmatpush1.xpose.msra.mxu0 0.0
    %212 = vmatprep.subr.mxu0 0.0
    %213 = vmatpush1.xpose.msra.mxu0 0.0
    %214 = vmatprep.subr.mxu0 0.0
    %215 = vmatpush1.xpose.msra.mxu0 0.0
    %216 = vmatprep.subr.mxu0 0.0
    %217 = vmatpush1.xpose.msra.mxu0 0.0
    %218 = vmatprep.subr.mxu0 0.0
    %219 = vmatpush1.xpose.msra.mxu0 0.0
    %220 = vmatprep.mubr.f32.mxu0 0.0
    %221 = vmatmul.mubr.f32.gmra.mrb[0].mxu0 %v97
    %v222 = vpop.f32.mrb[0].mxu0
    %v223 = vadd.f32 %v46, %v222
    %v224 = vpop.f32.mrb[0].mxu0
    %225 = vmatprep.mubr.f32.mxu0 0.0
    %226 = vmatmul.mubr.f32.gmra.mrb[0].mxu0 %v100
    %v227 = vpop.f32.mrb[0].mxu0
    %v228 = vadd.f32 %v51, %v227
    %v229 = vpop.f32.mrb[0].mxu0
    %230 = vmatprep.mubr.f32.mxu0 0.0
    %231 = vmatmul.mubr.f32.gmra.mrb[0].mxu0 %v103
    %v232 = vpop.f32.mrb[0].mxu0
    %v233 = vadd.f32 %v56, %v232
    %v234 = vpop.f32.mrb[0].mxu0
    %235 = vmatprep.mubr.f32.mxu0 0.0
    %236 = vmatmul.mubr.f32.gmra.mrb[0].mxu0 %v106
    %v237 = vpop.f32.mrb[0].mxu0
    %v238 = vadd.f32 %v61, %v237
    %v239 = vpop.f32.mrb[0].mxu0
    %240 = vdwg.mxu0
    %v241 = vmax.f32 %v223, 0.0
    %v242 = vmax.f32 %v228, 0.0
    %v243 = vmax.f32 %v233, 0.0
    %v244 = vmax.f32 %v238, 0.0
    %v245 = vld [vmem:[%s3] sm:$0xff]
    %v246 = vld [vmem:[%s3 + $0x8] sm:$0xff]
    %v247 = vld [vmem:[%s3 + $0x10] sm:$0xff]
    %v248 = vld [vmem:[%s3 + $0x18] sm:$0xff]
    %v249 = vld [vmem:[%s4] sm:$0xff]
    %251 = vset.pattern.permute.xlu0 0
    %252 = vperm.xlu0 %251, %v249
    %v253 = vpop.permute.xlu0 %252
    %255 = vxpose.xlu0.b32.start [1/16] %v245, 128
    %256 = vxpose.xlu0.b32.cont [2/16] %v246, 128
    %257 = vxpose.xlu0.b32.cont [3/16] %v247, 128
    %258 = vxpose.xlu0.b32.cont [4/16] %v248, 128
    %259 = vxpose.xlu0.b32.cont [5/16] 0.0, 128
    %260 = vxpose.xlu0.b32.cont [6/16] 0.0, 128
    %261 = vxpose.xlu0.b32.cont [7/16] 0.0, 128
    %262 = vxpose.xlu0.b32.cont [8/16] 0.0, 128
    %263 = vxpose.xlu0.b32.cont [9/16] 0.0, 128
    %264 = vxpose.xlu0.b32.cont [10/16] 0.0, 128
    %265 = vxpose.xlu0.b32.cont [11/16] 0.0, 128
    %266 = vxpose.xlu0.b32.cont [12/16] 0.0, 128
    %267 = vxpose.xlu0.b32.cont [13/16] 0.0, 128
    %268 = vxpose.xlu0.b32.cont [14/16] 0.0, 128
    %269 = vxpose.xlu0.b32.cont [15/16] 0.0, 128
    %270 = vxpose.xlu0.b32.end [16/16] 0.0, 128
    %v271 = vpop.trf.xlu0
    %v272 = vpop.trf.xlu0
    %v273 = vpop.trf.xlu0
    %v274 = vpop.trf.xlu0
    %v275 = vpop.trf.xlu0
    %v276 = vpop.trf.xlu0
    %v277 = vpop.trf.xlu0
    %v278 = vpop.trf.xlu0
    %v279 = vpop.trf.xlu0
    %v280 = vpop.trf.xlu0
    %v281 = vpop.trf.xlu0
    %v282 = vpop.trf.xlu0
    %v283 = vpop.trf.xlu0
    %v284 = vpop.trf.xlu0
    %v285 = vpop.trf.xlu0
    %v286 = vpop.trf.xlu0
    %vm287 = vcmask 261120
    %v289 = vsel %vm287, %v271, 0
    %291 = vmatprep.subr.mxu0 0.0
    %292 = vmatpush1.msra.mxu0 %v241
    %293 = vmatprep.subr.mxu0 0.0
    %294 = vmatpush1.msra.mxu0 %v242
    %295 = vmatprep.subr.mxu0 0.0
    %296 = vmatpush1.msra.mxu0 %v243
    %297 = vmatprep.subr.mxu0 0.0
    %298 = vmatpush1.msra.mxu0 %v244
    %299 = vmatprep.subr.mxu0 0.0
    %300 = vmatpush1.msra.mxu0 0.0
    %301 = vmatprep.subr.mxu0 0.0
    %302 = vmatpush1.msra.mxu0 0.0
    %303 = vmatprep.subr.mxu0 0.0
    %304 = vmatpush1.msra.mxu0 0.0
    %305 = vmatprep.subr.mxu0 0.0
    %306 = vmatpush1.msra.mxu0 0.0
    %307 = vmatprep.subr.mxu0 0.0
    %308 = vmatpush1.msra.mxu0 0.0
    %309 = vmatprep.subr.mxu0 0.0
    %310 = vmatpush1.msra.mxu0 0.0
    %311 = vmatprep.subr.mxu0 0.0
    %312 = vmatpush1.msra.mxu0 0.0
    %313 = vmatprep.subr.mxu0 0.0
    %314 = vmatpush1.msra.mxu0 0.0
    %315 = vmatprep.subr.mxu0 0.0
    %316 = vmatpush1.msra.mxu0 0.0
    %317 = vmatprep.subr.mxu0 0.0
    %318 = vmatpush1.msra.mxu0 0.0
    %319 = vmatprep.subr.mxu0 0.0
    %320 = vmatpush1.msra.mxu0 0.0
    %321 = vmatprep.subr.mxu0 0.0
    %322 = vmatpush1.msra.mxu0 0.0
    %323 = vmatprep.subr.mxu0 0.0
    %324 = vmatpush1.msra.mxu0 0.0
    %325 = vmatprep.subr.mxu0 0.0
    %326 = vmatpush1.msra.mxu0 0.0
    %327 = vmatprep.subr.mxu0 0.0
    %328 = vmatpush1.msra.mxu0 0.0
    %329 = vmatprep.subr.mxu0 0.0
    %330 = vmatpush1.msra.mxu0 0.0
    %331 = vmatprep.subr.mxu0 0.0
    %332 = vmatpush1.msra.mxu0 0.0
    %333 = vmatprep.subr.mxu0 0.0
    %334 = vmatpush1.msra.mxu0 0.0
    %335 = vmatprep.subr.mxu0 0.0
    %336 = vmatpush1.msra.mxu0 0.0
    %337 = vmatprep.subr.mxu0 0.0
    %338 = vmatpush1.msra.mxu0 0.0
    %339 = vmatprep.subr.mxu0 0.0
    %340 = vmatpush1.msra.mxu0 0.0
    %341 = vmatprep.subr.mxu0 0.0
    %342 = vmatpush1.msra.mxu0 0.0
    %343 = vmatprep.subr.mxu0 0.0
    %344 = vmatpush1.msra.mxu0 0.0
    %345 = vmatprep.subr.mxu0 0.0
    %346 = vmatpush1.msra.mxu0 0.0
    %347 = vmatprep.subr.mxu0 0.0
    %348 = vmatpush1.msra.mxu0 0.0
    %349 = vmatprep.subr.mxu0 0.0
    %350 = vmatpush1.msra.mxu0 0.0
    %351 = vmatprep.subr.mxu0 0.0
    %352 = vmatpush1.msra.mxu0 0.0
    %353 = vmatprep.subr.mxu0 0.0
    %354 = vmatpush1.msra.mxu0 0.0
    %355 = vmatprep.mubr.f32.mxu0 0.0
    %356 = vmatmul.mubr.f32.gmra.mrb[0].mxu0 %v289
    %v357 = vpop.f32.mrb[0].mxu0
    %v358 = vadd.f32 %v253, %v357
    %v359 = vpop.f32.mrb[0].mxu0
    %360 = vdwg.mxu0
    %361 = vst [vmem:[#allocation2] sm:$0xff] %v358
    // Predicated region
    $region22: #{tpu_custom_call.1} parent=1 // pred_check
      _
    $region23: #{tpu_custom_call.1} parent=1 // pred_check_branch
      %363 = sbr.rel (0) target = $region25
    $region24: #{tpu_custom_call.1} parent=1 // pred_region
      %s365 = ssub.s32 128, 128
      %366 = vsyncadd [#allocation3], %s365
      %s368 = sshll.u32 [#allocation2], 4
      %s369 = int_to_ptr.vmem [resolvable:$true] %s368
      %371 = dma.vmem_to_hbm [thread:$0]  %s369, 128, %s5, [#allocation3]
    $region25: #{tpu_custom_call.1} parent=1 // pred_fallthru
      _
    // Predicated region
    $region26: #{tpu_custom_call.1} parent=1 // pred_check
      _
    $region27: #{tpu_custom_call.1} parent=1 // pred_check_branch
      %373 = sbr.rel (0) target = $region29
    $region28: #{tpu_custom_call.1} parent=1 // pred_region
      %374 = dma.done [#allocation3], 128
    $region29: #{tpu_custom_call.1} parent=1 // pred_fallthru
      _
    %375 = vsyncpa [#allocation3], 1

</llo_original>
